<compile_context>
chip_gen: v7x
topology: tpu7x:2x2x1
jax: 0.10.0
libtpu: 0.0.40
codegen_flags: <defaults>
</compile_context>

<pallas_src>
import jax
import jax.numpy as jnp
from jax.experimental import pallas as pl
from jax.experimental.pallas import tpu as pltpu


IN_FEATURES = 29

# Shared row offsets inside the packed slabs (all 16-aligned -> clean bf16 sublane packing).
_R1, _R2, _R3, _R4, _R5 = 0, 64, 96, 112, 128
_SLAB_ROWS, _SLAB_COLS = 144, 64     # bf16 transposed-weight slab; bias slab is (144, 1) f32


def _round_up(n, m):
    return ((n + m - 1) // m) * m


def lol_classifier_kernel(xT_ref, w_ref, b_ref, o_ref):
    # Activations are (features, TB): feature axis on sublanes, batch on lanes.
    xT = xT_ref[...]                                   # (29, TB) bf16 -> MXU operand as-is

    # Static slices of the resident parameter slabs (BatchNorm already folded into layer 1).
    w1t = w_ref[_R1:_R1 + 64, 0:29]                    # bf16, stored transposed
    w2t = w_ref[_R2:_R2 + 32, 0:64]
    w3t = w_ref[_R3:_R3 + 16, 0:32]
    w4t = w_ref[_R4:_R4 + 8, 0:16]
    w5t = w_ref[_R5:_R5 + 1, 0:8]
    b1 = b_ref[_R1:_R1 + 64, :]                        # f32 column vectors, broadcast on lanes
    b2 = b_ref[_R2:_R2 + 32, :]
    b3 = b_ref[_R3:_R3 + 16, :]
    b4 = b_ref[_R4:_R4 + 8, :]
    b5 = b_ref[_R5:_R5 + 1, :]

    # layer_1 .. layer_4 : bf16 x bf16 MXU matmul, f32 accumulate; bias/ReLU in f32 (VPU).
    h = jnp.maximum(jnp.dot(w1t, xT, preferred_element_type=jnp.float32) + b1, 0.0)
    h = jnp.maximum(jnp.dot(w2t, h.astype(jnp.bfloat16),
                            preferred_element_type=jnp.float32) + b2, 0.0)
    h = jnp.maximum(jnp.dot(w3t, h.astype(jnp.bfloat16),
                            preferred_element_type=jnp.float32) + b3, 0.0)
    h = jnp.maximum(jnp.dot(w4t, h.astype(jnp.bfloat16),
                            preferred_element_type=jnp.float32) + b4, 0.0)   # (8, TB) f32

    # layer_out : (1,8)@(8,TB) -> lane-dense (1, TB) logits; sigmoid's exp goes to the EUP.
    z = jnp.dot(w5t, h.astype(jnp.bfloat16), preferred_element_type=jnp.float32) + b5
    o_ref[...] = jax.nn.sigmoid(z)


def lol_classifier_forward(x, w_slab, b_slab, *, tb=2048):
    """x: (B, 29) float32.  w_slab: (144, 64) bf16, b_slab: (144, 1) f32 from pack_params()."""
    B, F = x.shape
    assert F == IN_FEATURES, f"expected {IN_FEATURES} input features, got {F}"

    # Lane-aligned batch tile (multiple of 128).  For moderate/large B, cap the tile so the
    # grid has >= 2 tiles and the 'parallel' axis can feed both v7x TensorCores.
    tb = max(128, _round_up(min(int(tb), max(B, 128)), 128))
    if B > 128:
        tb = min(tb, _round_up(pl.cdiv(B, 2), 128))
    b_pad = _round_up(B, tb)
    num_tiles = b_pad // tb

    # Feature-major (lane = batch) bf16 activation stream; layout plumbing only.
    xT = jnp.pad(x, ((0, b_pad - B), (0, 0))).astype(jnp.bfloat16).T        # (29, b_pad)

    flops = 2 * b_pad * (29 * 64 + 64 * 32 + 32 * 16 + 16 * 8 + 8 * 1)
    bytes_accessed = (xT.size * 2 + b_pad * 4
                      + _SLAB_ROWS * _SLAB_COLS * 2 + _SLAB_ROWS * 4)

    out = pl.pallas_call(
        lol_classifier_kernel,
        out_shape=jax.ShapeDtypeStruct((1, b_pad), jnp.float32),
        grid=(num_tiles,),
        in_specs=[
            pl.BlockSpec((IN_FEATURES, tb), lambda i: (0, i)),         # streamed activations
            pl.BlockSpec((_SLAB_ROWS, _SLAB_COLS), lambda i: (0, 0)),  # resident bf16 weights
            pl.BlockSpec((_SLAB_ROWS, 1), lambda i: (0, 0)),           # resident f32 biases
        ],
        out_specs=pl.BlockSpec((1, tb), lambda i: (0, i)),             # lane-dense output row
        compiler_params=pltpu.CompilerParams(
            dimension_semantics=("parallel",)),
        cost_estimate=pl.CostEstimate(
            flops=flops, transcendentals=b_pad, bytes_accessed=bytes_accessed),
    )(xT, w_slab, b_slab)

    return out[0, :B].reshape(B, 1)


def pack_params(params, eps=1e-5):
    """Fold eval-mode BatchNorm1d into layer 1; pack transposed weights (bf16) + biases (f32)."""
    scale = params["bn_gamma"] * jax.lax.rsqrt(params["bn_var"] + eps)      # (29,)
    shift = params["bn_beta"] - params["bn_mean"] * scale                   # (29,)
    w1f = params["w1"] * scale[:, None]                                     # (29, 64)
    b1f = params["b1"] + shift @ params["w1"]                               # (64,)

    w = jnp.zeros((_SLAB_ROWS, _SLAB_COLS), jnp.float32)
    w = w.at[_R1:_R1 + 64, 0:29].set(w1f.T)
    w = w.at[_R2:_R2 + 32, 0:64].set(params["w2"].T)
    w = w.at[_R3:_R3 + 16, 0:32].set(params["w3"].T)
    w = w.at[_R4:_R4 + 8, 0:16].set(params["w4"].T)
    w = w.at[_R5:_R5 + 1, 0:8].set(params["w5"].T)

    b = jnp.zeros((_SLAB_ROWS, 1), jnp.float32)
    b = b.at[_R1:_R1 + 64, 0].set(b1f)
    b = b.at[_R2:_R2 + 32, 0].set(params["b2"])
    b = b.at[_R3:_R3 + 16, 0].set(params["b3"])
    b = b.at[_R4:_R4 + 8, 0].set(params["b4"])
    b = b.at[_R5:_R5 + 1, 0].set(params["b5"])
    return w.astype(jnp.bfloat16), b


def init_params(key):
    """Deterministic synthetic parameters matching LOLClassifier shapes.

    Weights are stored (in_features, out_features); non-trivial BatchNorm running stats
    and affine parameters exercise the BN fold.
    """
    dims = [(29, 64), (64, 32), (32, 16), (16, 8), (8, 1)]
    keys = jax.random.split(key, 2 * len(dims) + 4)
    params = {}
    for i, (din, dout) in enumerate(dims):
        kw, kb = keys[2 * i], keys[2 * i + 1]
        params[f"w{i + 1}"] = (jax.random.normal(kw, (din, dout), jnp.float32)
                               * (1.0 / jnp.sqrt(din)))
        params[f"b{i + 1}"] = jax.random.normal(kb, (dout,), jnp.float32) * 0.01
    kg, kbt, km, kv = keys[-4:]
    params["bn_gamma"] = 1.0 + 0.1 * jax.random.normal(kg, (IN_FEATURES,), jnp.float32)
    params["bn_beta"] = 0.1 * jax.random.normal(kbt, (IN_FEATURES,), jnp.float32)
    params["bn_mean"] = 0.1 * jax.random.normal(km, (IN_FEATURES,), jnp.float32)
    params["bn_var"] = 1.0 + 0.1 * jnp.abs(jax.random.normal(kv, (IN_FEATURES,), jnp.float32))
    return params


def reference_forward(x, params, eps=1e-5):
    """Pure-JAX f32 reference (explicit eval-mode BatchNorm, un-folded, un-quantized weights)."""
    scale = params["bn_gamma"] / jnp.sqrt(params["bn_var"] + eps)
    h = (x - params["bn_mean"]) * scale + params["bn_beta"]
    for i in range(1, 5):
        h = jnp.maximum(h @ params[f"w{i}"] + params[f"b{i}"], 0.0)
    return jax.nn.sigmoid(h @ params["w5"] + params["b5"])


def matched_reference(x, w_slab, b_slab):
    """Plain-JAX mirror of the kernel math (bf16 MXU operands, f32 accumulate/bias/ReLU)."""
    def lin(wt, h, b):
        return jnp.maximum(jnp.dot(wt, h, preferred_element_type=jnp.float32) + b, 0.0)

    xT = x.astype(jnp.bfloat16).T
    h = lin(w_slab[_R1:_R1 + 64, 0:29], xT, b_slab[_R1:_R1 + 64, :])
    h = lin(w_slab[_R2:_R2 + 32, 0:64], h.astype(jnp.bfloat16), b_slab[_R2:_R2 + 32, :])
    h = lin(w_slab[_R3:_R3 + 16, 0:32], h.astype(jnp.bfloat16), b_slab[_R3:_R3 + 16, :])
    h = lin(w_slab[_R4:_R4 + 8, 0:16], h.astype(jnp.bfloat16), b_slab[_R4:_R4 + 8, :])
    z = jnp.dot(w_slab[_R5:_R5 + 1, 0:8], h.astype(jnp.bfloat16),
                preferred_element_type=jnp.float32) + b_slab[_R5:_R5 + 1, :]
    return jax.nn.sigmoid(z).T


if __name__ == "__main__":
    key = jax.random.PRNGKey(0)
    kx, kp = jax.random.split(key)
    B = 300  # not a multiple of the tile -> exercises batch padding + a multi-tile grid
    x = jax.random.normal(kx, (B, IN_FEATURES), jnp.float32)
    params = init_params(kp)
    w_slab, b_slab = pack_params(params)

    out = lol_classifier_forward(x, w_slab, b_slab, tb=128)   # grid=(3,), pipelined tiles
    out = jax.block_until_ready(out)
    assert out.shape == (B, 1)

    # Tight check vs. a plain-JAX mirror of the kernel's bf16-MXU / f32-accumulate math.
    ref_m = matched_reference(x, w_slab, b_slab)
    assert jnp.allclose(out, ref_m, atol=2e-3), "mismatch vs matched-precision reference"

    # Sanity check vs. the full-f32 eval-mode reference (slack covers bf16 rounding of x/W).
    ref32 = reference_forward(x, params)
    assert jnp.allclose(out, ref32, atol=5e-2), "mismatch vs f32 reference"

    print("KERNEL_OK")
</pallas_src>

<mosaic_0001>
module attributes {stable_mosaic.version = 11 : i64} {
  func.func @lol_classifier_kernel(%arg0: i32, %arg1: memref<29x128xbf16, #tpu.memory_space<vmem>>, %arg2: memref<144x64xbf16, #tpu.memory_space<vmem>>, %arg3: memref<144x1xf32, #tpu.memory_space<vmem>>, %arg4: memref<1x128xf32, #tpu.memory_space<vmem>>) attributes {dimension_semantics = [#tpu.dimension_semantics<parallel>], iteration_bounds = array<i64: 3>, scalar_prefetch = 0 : i64, scratch_operands = 0 : i64, tpu.core_type = #tpu.core_type<tc>, window_params = [{transform_indices = @transform_0, window_bounds = array<i64: 29, 128>}, {pipeline_mode = #tpu.pipeline_mode<synchronous>, transform_indices = @transform_1, window_bounds = array<i64: 144, 64>}, {pipeline_mode = #tpu.pipeline_mode<synchronous>, transform_indices = @transform_2, window_bounds = array<i64: 144, 1>}, {transform_indices = @transform_3, window_bounds = array<i64: 1, 128>}]} {
    %c0 = arith.constant 0 : index
    %c0_0 = arith.constant 0 : index
    %0 = vector.load %arg1[%c0, %c0_0] : memref<29x128xbf16, #tpu.memory_space<vmem>>, vector<29x128xbf16>
    %c0_1 = arith.constant 0 : index
    %c0_2 = arith.constant 0 : index
    %1 = vector.load %arg2[%c0_1, %c0_2] : memref<144x64xbf16, #tpu.memory_space<vmem>>, vector<64x29xbf16>
    %c64 = arith.constant 64 : index
    %c0_3 = arith.constant 0 : index
    %2 = vector.load %arg2[%c64, %c0_3] : memref<144x64xbf16, #tpu.memory_space<vmem>>, vector<32x64xbf16>
    %c96 = arith.constant 96 : index
    %c0_4 = arith.constant 0 : index
    %3 = vector.load %arg2[%c96, %c0_4] : memref<144x64xbf16, #tpu.memory_space<vmem>>, vector<16x32xbf16>
    %c112 = arith.constant 112 : index
    %c0_5 = arith.constant 0 : index
    %4 = vector.load %arg2[%c112, %c0_5] : memref<144x64xbf16, #tpu.memory_space<vmem>>, vector<8x16xbf16>
    %c128 = arith.constant 128 : index
    %c0_6 = arith.constant 0 : index
    %5 = vector.load %arg2[%c128, %c0_6] : memref<144x64xbf16, #tpu.memory_space<vmem>>, vector<1x8xbf16>
    %c0_7 = arith.constant 0 : index
    %c0_8 = arith.constant 0 : index
    %6 = vector.load %arg3[%c0_7, %c0_8] : memref<144x1xf32, #tpu.memory_space<vmem>>, vector<64x1xf32>
    %c64_9 = arith.constant 64 : index
    %c0_10 = arith.constant 0 : index
    %7 = vector.load %arg3[%c64_9, %c0_10] : memref<144x1xf32, #tpu.memory_space<vmem>>, vector<32x1xf32>
    %c96_11 = arith.constant 96 : index
    %c0_12 = arith.constant 0 : index
    %8 = vector.load %arg3[%c96_11, %c0_12] : memref<144x1xf32, #tpu.memory_space<vmem>>, vector<16x1xf32>
    %c112_13 = arith.constant 112 : index
    %c0_14 = arith.constant 0 : index
    %9 = vector.load %arg3[%c112_13, %c0_14] : memref<144x1xf32, #tpu.memory_space<vmem>>, vector<8x1xf32>
    %c128_15 = arith.constant 128 : index
    %c0_16 = arith.constant 0 : index
    %10 = vector.load %arg3[%c128_15, %c0_16] : memref<144x1xf32, #tpu.memory_space<vmem>>, vector<1x1xf32>
    %cst = arith.constant dense<0.000000e+00> : vector<64x128xf32>
    %11 = tpu.matmul %1, %0, %cst {dimension_numbers = #tpu.dot_dimension_numbers<[1], [0], [0], [1], [0, 0, 1, 1], [], []>} : vector<64x29xbf16>, vector<29x128xbf16>, vector<64x128xf32> -> vector<64x128xf32>
    %12 = vector.broadcast %6 : vector<64x1xf32> to vector<64x128xf32>
    %13 = arith.addf %11, %12 : vector<64x128xf32>
    %cst_17 = arith.constant 0.000000e+00 : f32
    %14 = vector.broadcast %cst_17 : f32 to vector<64x128xf32>
    %15 = arith.maximumf %13, %14 : vector<64x128xf32>
    %16 = arith.truncf %15 : vector<64x128xf32> to vector<64x128xbf16>
    %cst_18 = arith.constant dense<0.000000e+00> : vector<32x128xf32>
    %17 = tpu.matmul %2, %16, %cst_18 {dimension_numbers = #tpu.dot_dimension_numbers<[1], [0], [0], [1], [0, 0, 1, 1], [], []>} : vector<32x64xbf16>, vector<64x128xbf16>, vector<32x128xf32> -> vector<32x128xf32>
    %18 = vector.broadcast %7 : vector<32x1xf32> to vector<32x128xf32>
    %19 = arith.addf %17, %18 : vector<32x128xf32>
    %cst_19 = arith.constant 0.000000e+00 : f32
    %20 = vector.broadcast %cst_19 : f32 to vector<32x128xf32>
    %21 = arith.maximumf %19, %20 : vector<32x128xf32>
    %22 = arith.truncf %21 : vector<32x128xf32> to vector<32x128xbf16>
    %cst_20 = arith.constant dense<0.000000e+00> : vector<16x128xf32>
    %23 = tpu.matmul %3, %22, %cst_20 {dimension_numbers = #tpu.dot_dimension_numbers<[1], [0], [0], [1], [0, 0, 1, 1], [], []>} : vector<16x32xbf16>, vector<32x128xbf16>, vector<16x128xf32> -> vector<16x128xf32>
    %24 = vector.broadcast %8 : vector<16x1xf32> to vector<16x128xf32>
    %25 = arith.addf %23, %24 : vector<16x128xf32>
    %cst_21 = arith.constant 0.000000e+00 : f32
    %26 = vector.broadcast %cst_21 : f32 to vector<16x128xf32>
    %27 = arith.maximumf %25, %26 : vector<16x128xf32>
    %28 = arith.truncf %27 : vector<16x128xf32> to vector<16x128xbf16>
    %cst_22 = arith.constant dense<0.000000e+00> : vector<8x128xf32>
    %29 = tpu.matmul %4, %28, %cst_22 {dimension_numbers = #tpu.dot_dimension_numbers<[1], [0], [0], [1], [0, 0, 1, 1], [], []>} : vector<8x16xbf16>, vector<16x128xbf16>, vector<8x128xf32> -> vector<8x128xf32>
    %30 = vector.broadcast %9 : vector<8x1xf32> to vector<8x128xf32>
    %31 = arith.addf %29, %30 : vector<8x128xf32>
    %cst_23 = arith.constant 0.000000e+00 : f32
    %32 = vector.broadcast %cst_23 : f32 to vector<8x128xf32>
    %33 = arith.maximumf %31, %32 : vector<8x128xf32>
    %34 = arith.truncf %33 : vector<8x128xf32> to vector<8x128xbf16>
    %cst_24 = arith.constant dense<0.000000e+00> : vector<1x128xf32>
    %35 = tpu.matmul %5, %34, %cst_24 {dimension_numbers = #tpu.dot_dimension_numbers<[1], [0], [0], [1], [0, 0, 1, 1], [], []>} : vector<1x8xbf16>, vector<8x128xbf16>, vector<1x128xf32> -> vector<1x128xf32>
    %36 = vector.broadcast %10 : vector<1x1xf32> to vector<1x128xf32>
    %37 = arith.addf %35, %36 : vector<1x128xf32>
    %38 = arith.negf %37 : vector<1x128xf32>
    %39 = math.exp %38 : vector<1x128xf32>
    %cst_25 = arith.constant 1.000000e+00 : f32
    %40 = vector.broadcast %cst_25 : f32 to vector<1x128xf32>
    %41 = arith.addf %40, %39 : vector<1x128xf32>
    %42 = arith.divf %40, %41 : vector<1x128xf32>
    %c0_26 = arith.constant 0 : index
    %c0_27 = arith.constant 0 : index
    %43 = vector.load %arg4[%c0_26, %c0_27] : memref<1x128xf32, #tpu.memory_space<vmem>>, vector<1x128xf32>
    tpu.vector_store %arg4[%c0_26, %c0_27], %42 {strides = array<i32>} : memref<1x128xf32, #tpu.memory_space<vmem>>, vector<1x128xf32>,
    return
  }
  func.func @transform_0(%arg0: i32) -> (i32, i32) {
    %c0_i32 = arith.constant 0 : i32
    %c0_i32_0 = arith.constant 0 : i32
    return %c0_i32, %arg0 : i32, i32
  }
  func.func @transform_1(%arg0: i32) -> (i32, i32) {
    %c0_i32 = arith.constant 0 : i32
    %c0_i32_0 = arith.constant 0 : i32
    %c0_i32_1 = arith.constant 0 : i32
    return %c0_i32, %c0_i32_0 : i32, i32
  }
  func.func @transform_2(%arg0: i32) -> (i32, i32) {
    %c0_i32 = arith.constant 0 : i32
    %c0_i32_0 = arith.constant 0 : i32
    %c0_i32_1 = arith.constant 0 : i32
    return %c0_i32, %c0_i32_0 : i32, i32
  }
  func.func @transform_3(%arg0: i32) -> (i32, i32) {
    %c0_i32 = arith.constant 0 : i32
    %c0_i32_0 = arith.constant 0 : i32
    return %c0_i32, %arg0 : i32, i32
  }
}

</mosaic_0001>

<llo_original>
// kernel: tpu_custom_call.1
$region0: #{tpu_custom_call.1}
  #allocation0 [shape = 'u32[]', space=smem, size = 0x4, offset = 0x4, fixed_abs, tag = 'smem constant byte address 0x4 - core index']
  #allocation1 [shape = 'u32[144,128]{1,0:T(1,128)}', space=vmem, size = 0x12000, scoped, tag = 'internal scratch']
  %s0 = inlined_call_operand.vmem [shape: bf16[29,384], index: 0, kind: input, shape index: {}]
  %s1 = inlined_call_operand.vmem [shape: bf16[144,64], index: 1, kind: input, shape index: {}]
  %s2 = inlined_call_operand.vmem [shape: f32[144,1], index: 2, kind: input, shape index: {}]
  %s3 = inlined_call_operand.hbm [shape: f32[1,384], index: 3, kind: output, shape index: {}]
  %s4 = sld [smem:[#allocation0]]
  $region86: #{tpu_custom_call.1} parent=0
    _
  %s6 = ssub.s32 1, %s4
  %s7 = scalar_select 0, %s6, %s4
  $region1: #{tpu_custom_call.1} parent=0
    #allocation2 [shape = 'u8[16384]{0}', space=vmem, size = 0x4000, scoped, tag = 'input window, operand 0']
    #allocation3 [shape = 'u8[1024]{0}', space=vmem, size = 0x400, scoped, tag = 'output window, operand 0']
    #allocation4 [shape = 's32[2]{0}', space=sflag, size = 0x8, scoped, tag = 'scoped memory for tpu_custom_call.1']
    %8 = vsyncpa [#allocation4], 0
    %s9 = scalar_lea.sflag [#allocation4], 1
    %10 = vsyncpa %s9, 0
    loop: start=0, step=1, limit=5
    $region2: #{tpu_custom_call.1} parent=1 // loop_pre_header
      _
    $region3: #{tpu_custom_call.1} parent=1 // loop_header
      %s12 = sphi 0, %s16
      %p13 = scmp.ge.s32.totalorder %s12, 5
      %s22 = sphi 0, %s24
      %s25 = sphi 0, %s22
      %s26 = sphi 0, %s25
      %s42 = sphi 0, %s26
      %s46 = sphi 0, %s46
      %s48 = sphi 0, %s46
      %s49 = sphi 0, %s48
      %s63 = sphi 0, %s49
      %s67 = sphi 0, %s67
      %s69 = sphi 0, %s67
      %s70 = sphi 0, %s69
      %s84 = sphi 0, %s70
      %s90 = sphi 0, %s92
      %s93 = sphi 0, %s90
      %s94 = sphi 0, %s93
      %s110 = sphi 0, %s94
    $region4: #{tpu_custom_call.1} parent=1 // loop_header_branch
      %15 = sbr.rel (%p13) target = $region8
    $region5: #{tpu_custom_call.1} parent=1 // loop_body
      %s17 = ssub.s32 %s12, 1
      %s18 = ssub.s32 %s12, 2
      %s19 = sadd.s32 %s12, 1
      %s20 = ssub.s32 %s12, %s19
      %p21 = scmp.eq.s32.totalorder %s20, 0
      %s23 = sadd.s32 %s22, 1
      %s24 = scalar_select %p21, %s22, %s23
      %p27 = pneg %p21
      %p28 = scmp.eq.s32.totalorder %s12, 2
      %p29 = por %p27, %p28
      %p30 = scmp.ne.s32.totalorder %s22, %s25
      %p31 = scmp.eq.s32.totalorder %s12, 0
      %p32 = por %p30, %p31
      %p33 = scmp.ne.s32.totalorder %s22, %s25
      %p34 = scmp.eq.s32.totalorder %s17, 2
      %p35 = por %p33, %p34
      %p36 = scmp.ne.s32.totalorder %s25, %s26
      %p37 = scmp.eq.s32.totalorder %s17, 0
      %p38 = por %p36, %p37
      %p39 = scmp.ne.s32.totalorder %s25, %s26
      %p40 = scmp.eq.s32.totalorder %s18, 2
      %p41 = por %p39, %p40
      %p43 = scmp.ne.s32.totalorder %s26, %s42
      %p44 = scmp.eq.s32.totalorder %s18, 0
      %p45 = por %p43, %p44
      %s47 = sadd.s32 %s46, 1
      %p50 = scmp.eq.s32.totalorder %s12, 2
      %p51 = scmp.ne.s32.totalorder %s46, %s48
      %p52 = scmp.eq.s32.totalorder %s12, 0
      %p53 = por %p51, %p52
      %p54 = scmp.ne.s32.totalorder %s46, %s48
      %p55 = scmp.eq.s32.totalorder %s17, 2
      %p56 = por %p54, %p55
      %p57 = scmp.ne.s32.totalorder %s48, %s49
      %p58 = scmp.eq.s32.totalorder %s17, 0
      %p59 = por %p57, %p58
      %p60 = scmp.ne.s32.totalorder %s48, %s49
      %p61 = scmp.eq.s32.totalorder %s18, 2
      %p62 = por %p60, %p61
      %p64 = scmp.ne.s32.totalorder %s49, %s63
      %p65 = scmp.eq.s32.totalorder %s18, 0
      %p66 = por %p64, %p65
      %s68 = sadd.s32 %s67, 1
      %p71 = scmp.eq.s32.totalorder %s12, 2
      %p72 = scmp.ne.s32.totalorder %s67, %s69
      %p73 = scmp.eq.s32.totalorder %s12, 0
      %p74 = por %p72, %p73
      %p75 = scmp.ne.s32.totalorder %s67, %s69
      %p76 = scmp.eq.s32.totalorder %s17, 2
      %p77 = por %p75, %p76
      %p78 = scmp.ne.s32.totalorder %s69, %s70
      %p79 = scmp.eq.s32.totalorder %s17, 0
      %p80 = por %p78, %p79
      %p81 = scmp.ne.s32.totalorder %s69, %s70
      %p82 = scmp.eq.s32.totalorder %s18, 2
      %p83 = por %p81, %p82
      %p85 = scmp.ne.s32.totalorder %s70, %s84
      %p86 = scmp.eq.s32.totalorder %s18, 0
      %p87 = por %p85, %p86
      %s88 = ssub.s32 %s12, %s19
      %p89 = scmp.eq.s32.totalorder %s88, 0
      %s91 = sadd.s32 %s90, 1
      %s92 = scalar_select %p89, %s90, %s91
      %p95 = pneg %p89
      %p96 = scmp.eq.s32.totalorder %s12, 2
      %p97 = por %p95, %p96
      %p98 = scmp.ne.s32.totalorder %s90, %s93
      %p99 = scmp.eq.s32.totalorder %s12, 0
      %p100 = por %p98, %p99
      %p101 = scmp.ne.s32.totalorder %s90, %s93
      %p102 = scmp.eq.s32.totalorder %s17, 2
      %p103 = por %p101, %p102
      %p104 = scmp.ne.s32.totalorder %s93, %s94
      %p105 = scmp.eq.s32.totalorder %s17, 0
      %p106 = por %p104, %p105
      %p107 = scmp.ne.s32.totalorder %s93, %s94
      %p108 = scmp.eq.s32.totalorder %s18, 2
      %p109 = por %p107, %p108
      %p111 = scmp.ne.s32.totalorder %s94, %s110
      %p112 = scmp.eq.s32.totalorder %s18, 0
      %p113 = por %p111, %p112
      %p114 = scmp.le.s32.totalorder 1, %s12
      %p115 = scmp.lt.s32.totalorder %s12, 4
      %p116 = pnand %p114, %p115
      %p117 = pneg %p116
      // Predicated region
      $region9: #{tpu_custom_call.1} parent=5 // pred_check
        _
      $region10: #{tpu_custom_call.1} parent=5 // pred_check_branch
        %119 = sbr.rel (%p116) target = $region12
      $region11: #{tpu_custom_call.1} parent=5 // pred_region
        %s120 = ssub.s32 %s12, 1
        // Predicated region
        $region13: #{tpu_custom_call.1} parent=11 // pred_check
          %p121 = pneg %p59
        $region14: #{tpu_custom_call.1} parent=11 // pred_check_branch
          %123 = sbr.rel (%p121) target = $region16
        $region15: #{tpu_custom_call.1} parent=11 // pred_region
          _
        $region16: #{tpu_custom_call.1} parent=11 // pred_fallthru
          _
        // Predicated region
        $region17: #{tpu_custom_call.1} parent=11 // pred_check
          %p124 = pneg %p80
        $region18: #{tpu_custom_call.1} parent=11 // pred_check_branch
          %126 = sbr.rel (%p124) target = $region20
        $region19: #{tpu_custom_call.1} parent=11 // pred_region
          _
        $region20: #{tpu_custom_call.1} parent=11 // pred_fallthru
          _
      $region12: #{tpu_custom_call.1} parent=5 // pred_fallthru
        _
      %p127 = scmp.lt.s32.totalorder %s12, 3
      // Predicated region
      $region21: #{tpu_custom_call.1} parent=5 // pred_check
        %p128 = pneg %p127
      $region22: #{tpu_custom_call.1} parent=5 // pred_check_branch
        %130 = sbr.rel (%p128) target = $region24
      $region23: #{tpu_custom_call.1} parent=5 // pred_region
        // Predicated region
        $region25: #{tpu_custom_call.1} parent=23 // pred_check
          %p131 = pneg %p32
        $region26: #{tpu_custom_call.1} parent=23 // pred_check_branch
          %133 = sbr.rel (%p131) target = $region28
        $region27: #{tpu_custom_call.1} parent=23 // pred_region
          %s134 = sand.u32 %s22, 1
          %s135 = sand.u32 %s22, 1
          %s136 = smul.addr %s135, 16
          %s137 = scalar_lea.vmem [#allocation2], %s136
          %s138 = smul.addr %s12, 4
          %s139 = scalar_lea.vmem %s0, %s138
          // Predicated region
          $region29: #{tpu_custom_call.1} parent=27 // pred_check
            _
          $region30: #{tpu_custom_call.1} parent=27 // pred_check_branch
            %141 = sbr.rel (0) target = $region32
          $region31: #{tpu_custom_call.1} parent=27 // pred_region
            // Predicated region
            $region33: #{tpu_custom_call.1} parent=31 // pred_check
              _
            $region34: #{tpu_custom_call.1} parent=31 // pred_check_branch
              %143 = sbr.rel target = $region36
            $region35: #{tpu_custom_call.1} parent=31 // pred_region
              // Predicated region
              $region48: #{tpu_custom_call.1} parent=35 // pred_check
                _
              $region49: #{tpu_custom_call.1} parent=35 // pred_check_branch
                %164 = sbr.rel (0) target = $region51
              $region50: #{tpu_custom_call.1} parent=35 // pred_region
                loop: start=0, step=1, limit=1
                $region52: #{tpu_custom_call.1} parent=50 // loop_pre_header
                  _
                $region53: #{tpu_custom_call.1} parent=50 // loop_header
                  %s166 = sphi 0, %s170
                  %p167 = scmp.ge.s32.totalorder %s166, 1
                  %s171 = sphi %s139, %s139
                  %s172 = sphi %s137, %s137
                $region54: #{tpu_custom_call.1} parent=50 // loop_header_branch
                  %169 = sbr.rel (%p167) target = $region58
                $region55: #{tpu_custom_call.1} parent=50 // loop_body
                  _
                $region56: #{tpu_custom_call.1} parent=50 // loop_footer
                  %s170 = sadd.s32 1, %s166
                $region57: #{tpu_custom_call.1} parent=50 // loop_footer_branch
                  %165 = sbr.rel target = $region53
                $region58: #{tpu_custom_call.1} parent=50 // loop_exit
                  _
                loop: start=0, step=1, limit=1
                $region59: #{tpu_custom_call.1} parent=50 // loop_pre_header
                  _
                $region60: #{tpu_custom_call.1} parent=50 // loop_header
                  %s175 = sphi 0, %s179
                  %p176 = scmp.ge.s32.totalorder %s175, 1
                  %s180 = sphi %s139, %s139
                  %s181 = sphi %s137, %s137
                $region61: #{tpu_custom_call.1} parent=50 // loop_header_branch
                  %178 = sbr.rel (%p176) target = $region65
                $region62: #{tpu_custom_call.1} parent=50 // loop_body
                  %v182 = vld [vmem:[%s180] sm:$0xf]
                  %183 = vst [vmem:[%s181] sm:$0xf] %v182
                  %v184 = vld [vmem:[%s180 + $0xc] sm:$0xf]
                  %185 = vst [vmem:[%s181 + $0x4] sm:$0xf] %v184
                  %v186 = vld [vmem:[%s180 + $0x18] sm:$0xf]
                  %187 = vst [vmem:[%s181 + $0x8] sm:$0xf] %v186
                  %v188 = vld [vmem:[%s180 + $0x24] sm:$0xf]
                  %189 = vst [vmem:[%s181 + $0xc] sm:$0xf] %v188
                $region63: #{tpu_custom_call.1} parent=50 // loop_footer
                  %s179 = sadd.s32 1, %s175
                $region64: #{tpu_custom_call.1} parent=50 // loop_footer_branch
                  %174 = sbr.rel target = $region60
                $region65: #{tpu_custom_call.1} parent=50 // loop_exit
                  _
              $region51: #{tpu_custom_call.1} parent=35 // pred_fallthru
                _
            $region36: #{tpu_custom_call.1} parent=31 // pred_fallthru
              _
            // Predicated region
            $region37: #{tpu_custom_call.1} parent=31 // pred_check
              _
            $region38: #{tpu_custom_call.1} parent=31 // pred_check_branch
              %145 = sbr.rel (0) target = $region40
            $region39: #{tpu_custom_call.1} parent=31 // pred_region
              loop: start=0, step=1, limit=1
              $region41: #{tpu_custom_call.1} parent=39 // loop_pre_header
                _
              $region42: #{tpu_custom_call.1} parent=39 // loop_header
                %s148 = sphi 0, %s152
                %p149 = scmp.ge.s32.totalorder %s148, 1
                %s153 = sphi %s139, %s139
                %s154 = sphi %s137, %s137
              $region43: #{tpu_custom_call.1} parent=39 // loop_header_branch
                %151 = sbr.rel (%p149) target = $region47
              $region44: #{tpu_custom_call.1} parent=39 // loop_body
                %v155 = vld [vmem:[%s153] sm:$0xf]
                %156 = vst [vmem:[%s154] sm:$0xf] %v155
                %v157 = vld [vmem:[%s153 + $0xc] sm:$0xf]
                %158 = vst [vmem:[%s154 + $0x4] sm:$0xf] %v157
                %v159 = vld [vmem:[%s153 + $0x18] sm:$0xf]
                %160 = vst [vmem:[%s154 + $0x8] sm:$0xf] %v159
                %v161 = vld [vmem:[%s153 + $0x24] sm:$0xf]
                %162 = vst [vmem:[%s154 + $0xc] sm:$0xf] %v161
              $region45: #{tpu_custom_call.1} parent=39 // loop_footer
                %s152 = sadd.s32 1, %s148
              $region46: #{tpu_custom_call.1} parent=39 // loop_footer_branch
                %147 = sbr.rel target = $region42
              $region47: #{tpu_custom_call.1} parent=39 // loop_exit
                _
            $region40: #{tpu_custom_call.1} parent=31 // pred_fallthru
              _
          $region32: #{tpu_custom_call.1} parent=27 // pred_fallthru
            _
          %190 = vnop
        $region28: #{tpu_custom_call.1} parent=23 // pred_fallthru
          _
      $region24: #{tpu_custom_call.1} parent=5 // pred_fallthru
        _
      %p191 = scmp.le.s32.totalorder 1, %s12
      %p192 = scmp.lt.s32.totalorder %s12, 4
      %p193 = pnand %p191, %p192
      %p194 = pneg %p193
      // Predicated region
      $region66: #{tpu_custom_call.1} parent=5 // pred_check
        _
      $region67: #{tpu_custom_call.1} parent=5 // pred_check_branch
        %196 = sbr.rel (%p193) target = $region69
      $region68: #{tpu_custom_call.1} parent=5 // pred_region
        %s197 = ssub.s32 %s12, 1
        %s198 = sand.u32 %s25, 1
        %s199 = sand.u32 %s25, 1
        %s200 = smul.addr %s199, 16
        %s201 = scalar_lea.vmem [#allocation2], %s200
        // Predicated region
        $region70: #{tpu_custom_call.1} parent=68 // pred_check
          %p202 = pneg %p38
        $region71: #{tpu_custom_call.1} parent=68 // pred_check_branch
          %204 = sbr.rel (%p202) target = $region73
        $region72: #{tpu_custom_call.1} parent=68 // pred_region
          _
        $region73: #{tpu_custom_call.1} parent=68 // pred_fallthru
          _
        %s205 = sand.u32 %s25, 1
        %s206 = sand.u32 %s25, 1
        %s207 = smul.addr %s206, 16
        %s208 = scalar_lea.vmem [#allocation2], %s207
        %p209 = pneg %p38
        %p210 = pneg %p35
        %p211 = pneg %p59
        %p212 = pneg %p56
        %p213 = pneg %p80
        %p214 = pneg %p77
        %p215 = pneg %p106
        %p216 = pneg %p103
        %s217 = sand.u32 %s93, 1
        %s218 = scalar_lea.sflag [#allocation4], %s217
        %s219 = sand.u32 %s93, 1
        %s220 = scalar_lea.vmem [#allocation3], %s219
        %v222 = vld [vmem:[%s201] sm:$0xf]
        %v223 = vld [vmem:[%s201 + $0x4] sm:$0xf]
        %v224 = vld [vmem:[%s201 + $0x8] sm:$0xf]
        %v225 = vld [vmem:[%s201 + $0xc] sm:$0x7]
        %v226 = vld [vmem:[%s1] sm:$0xf]
        %v227 = vld [vmem:[%s1 + $0x4] sm:$0xf]
        %v228 = vld [vmem:[%s1 + $0x8] sm:$0xf]
        %v229 = vld [vmem:[%s1 + $0xc] sm:$0xf]
        %v230 = vld [vmem:[%s1 + $0x10] sm:$0xf]
        %v231 = vld [vmem:[%s1 + $0x14] sm:$0xf]
        %v232 = vld [vmem:[%s1 + $0x18] sm:$0xf]
        %v233 = vld [vmem:[%s1 + $0x1c] sm:$0xf]
        %v234 = vld [vmem:[%s1 + $0x20] sm:$0xf]
        %v235 = vld [vmem:[%s1 + $0x24] sm:$0xf]
        %v236 = vld [vmem:[%s1 + $0x28] sm:$0xf]
        %v237 = vld [vmem:[%s1 + $0x2c] sm:$0xf]
        %v238 = vld [vmem:[%s1 + $0x30] sm:$0xf]
        %v239 = vld [vmem:[%s1 + $0x34] sm:$0xf]
        %v240 = vld [vmem:[%s1 + $0x38] sm:$0xf]
        %v241 = vld [vmem:[%s1 + $0x40] sm:$0x1]
        %v242 = vld [vmem:[%s2] sm:$0xff]
        %v243 = vld [vmem:[%s2 + $0x8] sm:$0xff]
        %v244 = vld [vmem:[%s2 + $0x10] sm:$0xff]
        %v245 = vld [vmem:[%s2 + $0x18] sm:$0xff]
        %v246 = vld [vmem:[%s2 + $0x20] sm:$0xff]
        %v247 = vld [vmem:[%s2 + $0x28] sm:$0xff]
        %v248 = vld [vmem:[%s2 + $0x30] sm:$0xff]
        %v249 = vld [vmem:[%s2 + $0x38] sm:$0xff]
        %v250 = vld [vmem:[%s2 + $0x40] sm:$0xff]
        %v251 = vld [vmem:[%s2 + $0x48] sm:$0xff]
        %v252 = vld [vmem:[%s2 + $0x50] sm:$0xff]
        %v253 = vld [vmem:[%s2 + $0x58] sm:$0xff]
        %v254 = vld [vmem:[%s2 + $0x60] sm:$0xff]
        %v255 = vld [vmem:[%s2 + $0x68] sm:$0xff]
        %v256 = vld [vmem:[%s2 + $0x70] sm:$0xff]
        %v257 = vld [vmem:[%s2 + $0x80] sm:$0x1]
        %259 = vset.pattern.permute.xlu0 0
        %260 = vperm.xlu0 %259, %v242
        %v261 = vpop.permute.xlu0 %260
        %264 = vset.pattern.permute.xlu0 0
        %265 = vperm.xlu0 %264, %v243
        %v266 = vpop.permute.xlu0 %265
        %269 = vset.pattern.permute.xlu0 0
        %270 = vperm.xlu0 %269, %v244
        %v271 = vpop.permute.xlu0 %270
        %274 = vset.pattern.permute.xlu0 0
        %275 = vperm.xlu0 %274, %v245
        %v276 = vpop.permute.xlu0 %275
        %279 = vset.pattern.permute.xlu0 0
        %280 = vperm.xlu0 %279, %v246
        %v281 = vpop.permute.xlu0 %280
        %284 = vset.pattern.permute.xlu0 0
        %285 = vperm.xlu0 %284, %v247
        %v286 = vpop.permute.xlu0 %285
        %289 = vset.pattern.permute.xlu0 0
        %290 = vperm.xlu0 %289, %v248
        %v291 = vpop.permute.xlu0 %290
        %294 = vset.pattern.permute.xlu0 0
        %295 = vperm.xlu0 %294, %v249
        %v296 = vpop.permute.xlu0 %295
        %v306 = vunpack.c.l.b16 %v226
        %v307 = vunpack.c.l.b16 %v227
        %v308 = vunpack.c.l.b16 %v228
        %v309 = vunpack.c.l.b16 %v229
        %v310 = vunpack.c.l.b16 %v230
        %v311 = vunpack.c.l.b16 %v231
        %v312 = vunpack.c.l.b16 %v232
        %v313 = vunpack.c.l.b16 %v233
        %v314 = vpack.c.b16 %v307, %v306
        %v315 = vpack.c.b16 %v309, %v308
        %v316 = vpack.c.b16 %v311, %v310
        %v317 = vpack.c.b16 %v313, %v312
        %v322 = vunpack.c.l.b16 %v222
        %v323 = vunpack.c.l.b16 %v223
        %v324 = vunpack.c.l.b16 %v224
        %v325 = vunpack.c.l.b16 %v225
        %v326 = vpack.c.b16 %v323, %v322
        %v327 = vpack.c.b16 %v325, %v324
        %vm329 = vcmask 236544
        %v331 = vsel %vm329, %v314, 0
        %v334 = vsel %vm329, %v315, 0
        %v337 = vsel %vm329, %v316, 0
        %v340 = vsel %vm329, %v317, 0
        %vm342 = vcmask 1045504
        %vm343 = vcmask 1046528
        %v344 = vsel %vm342, 4294967295, 65535
        %v345 = vsel %vm343, %v344, 0
        %v347 = vand.u32 %v327, %v345
        %349 = vmatprep.subr.bf16.mxu0 0
        %350 = vmatpush1.bf16.msra.mxu0 %v326
        %351 = vmatprep.subr.bf16.mxu0 0
        %352 = vmatpush1.bf16.msra.mxu0 %v347
        %353 = vmatprep.subr.bf16.mxu0 0
        %354 = vmatpush1.bf16.msra.mxu0 0
        %355 = vmatprep.subr.bf16.mxu0 0
        %356 = vmatpush1.bf16.msra.mxu0 0
        %357 = vmatprep.subr.bf16.mxu0 0
        %358 = vmatpush1.bf16.msra.mxu0 0
        %359 = vmatprep.subr.bf16.mxu0 0
        %360 = vmatpush1.bf16.msra.mxu0 0
        %361 = vmatprep.subr.bf16.mxu0 0
        %362 = vmatpush1.bf16.msra.mxu0 0
        %363 = vmatprep.subr.bf16.mxu0 0
        %364 = vmatpush1.bf16.msra.mxu0 0
        %365 = vmatprep.subr.bf16.mxu0 0
        %366 = vmatpush1.bf16.msra.mxu0 0
        %367 = vmatprep.subr.bf16.mxu0 0
        %368 = vmatpush1.bf16.msra.mxu0 0
        %369 = vmatprep.subr.bf16.mxu0 0
        %370 = vmatpush1.bf16.msra.mxu0 0
        %371 = vmatprep.subr.bf16.mxu0 0
        %372 = vmatpush1.bf16.msra.mxu0 0
        %373 = vmatprep.subr.bf16.mxu0 0
        %374 = vmatpush1.bf16.msra.mxu0 0
        %375 = vmatprep.subr.bf16.mxu0 0
        %376 = vmatpush1.bf16.msra.mxu0 0
        %377 = vmatprep.subr.bf16.mxu0 0
        %378 = vmatpush1.bf16.msra.mxu0 0
        %379 = vmatprep.subr.bf16.mxu0 0
        %380 = vmatpush1.bf16.msra.mxu0 0
        %381 = vmatprep.mubr.bf16.mxu0 0
        %382 = vmatmul.mubr.bf16.gmra.mrb[0].mxu0 %v331
        %v383 = vpop.f32.mrb[0].mxu0
        %v384 = vadd.f32 %v261, %v383
        %v385 = vpop.f32.mrb[0].mxu0
        %v386 = vpop.f32.mrb[0].mxu0
        %v387 = vadd.f32 %v266, %v386
        %v388 = vpop.f32.mrb[0].mxu0
        %389 = vmatprep.mubr.bf16.mxu0 0
        %390 = vmatmul.mubr.bf16.gmra.mrb[0].mxu0 %v334
        %v391 = vpop.f32.mrb[0].mxu0
        %v392 = vadd.f32 %v271, %v391
        %v393 = vpop.f32.mrb[0].mxu0
        %v394 = vpop.f32.mrb[0].mxu0
        %v395 = vadd.f32 %v276, %v394
        %v396 = vpop.f32.mrb[0].mxu0
        %397 = vmatprep.mubr.bf16.mxu0 0
        %398 = vmatmul.mubr.bf16.gmra.mrb[0].mxu0 %v337
        %v399 = vpop.f32.mrb[0].mxu0
        %v400 = vadd.f32 %v281, %v399
        %v401 = vpop.f32.mrb[0].mxu0
        %v402 = vpop.f32.mrb[0].mxu0
        %v403 = vadd.f32 %v286, %v402
        %v404 = vpop.f32.mrb[0].mxu0
        %405 = vmatprep.mubr.bf16.mxu0 0
        %406 = vmatmul.mubr.bf16.gmra.mrb[0].mxu0 %v340
        %v407 = vpop.f32.mrb[0].mxu0
        %v408 = vadd.f32 %v291, %v407
        %v409 = vpop.f32.mrb[0].mxu0
        %v410 = vpop.f32.mrb[0].mxu0
        %v411 = vadd.f32 %v296, %v410
        %v412 = vpop.f32.mrb[0].mxu0
        %413 = vdwg.mxu0
        %v414 = vmax.f32 %v384, 0.0
        %v415 = vmax.f32 %v387, 0.0
        %v416 = vmax.f32 %v392, 0.0
        %v417 = vmax.f32 %v395, 0.0
        %v418 = vmax.f32 %v400, 0.0
        %v419 = vmax.f32 %v403, 0.0
        %v420 = vmax.f32 %v408, 0.0
        %v421 = vmax.f32 %v411, 0.0
        %v422 = vpack.c.bf16 %v415, %v414
        %v423 = vpack.c.bf16 %v417, %v416
        %v424 = vpack.c.bf16 %v419, %v418
        %v425 = vpack.c.bf16 %v421, %v420
        %427 = vset.pattern.permute.xlu0 0
        %428 = vperm.xlu0 %427, %v250
        %v429 = vpop.permute.xlu0 %428
        %432 = vset.pattern.permute.xlu0 0
        %433 = vperm.xlu0 %432, %v251
        %v434 = vpop.permute.xlu0 %433
        %437 = vset.pattern.permute.xlu0 0
        %438 = vperm.xlu0 %437, %v252
        %v439 = vpop.permute.xlu0 %438
        %442 = vset.pattern.permute.xlu0 0
        %443 = vperm.xlu0 %442, %v253
        %v444 = vpop.permute.xlu0 %443
        %v450 = vunpack.c.l.b16 %v234
        %v451 = vunpack.c.l.b16 %v235
        %v452 = vunpack.c.l.b16 %v236
        %v453 = vunpack.c.l.b16 %v237
        %v454 = vpack.c.b16 %v451, %v450
        %v455 = vpack.c.b16 %v453, %v452
        %vm456 = vcmask 523264
        %v458 = vsel %vm456, %v454, 0
        %v461 = vsel %vm456, %v455, 0
        %463 = vmatprep.subr.bf16.mxu0 0
        %464 = vmatpush1.bf16.msra.mxu0 %v422
        %465 = vmatprep.subr.bf16.mxu0 0
        %466 = vmatpush1.bf16.msra.mxu0 %v423
        %467 = vmatprep.subr.bf16.mxu0 0
        %468 = vmatpush1.bf16.msra.mxu0 %v424
        %469 = vmatprep.subr.bf16.mxu0 0
        %470 = vmatpush1.bf16.msra.mxu0 %v425
        %471 = vmatprep.subr.bf16.mxu0 0
        %472 = vmatpush1.bf16.msra.mxu0 0
        %473 = vmatprep.subr.bf16.mxu0 0
        %474 = vmatpush1.bf16.msra.mxu0 0
        %475 = vmatprep.subr.bf16.mxu0 0
        %476 = vmatpush1.bf16.msra.mxu0 0
        %477 = vmatprep.subr.bf16.mxu0 0
        %478 = vmatpush1.bf16.msra.mxu0 0
        %479 = vmatprep.subr.bf16.mxu0 0
        %480 = vmatpush1.bf16.msra.mxu0 0
        %481 = vmatprep.subr.bf16.mxu0 0
        %482 = vmatpush1.bf16.msra.mxu0 0
        %483 = vmatprep.subr.bf16.mxu0 0
        %484 = vmatpush1.bf16.msra.mxu0 0
        %485 = vmatprep.subr.bf16.mxu0 0
        %486 = vmatpush1.bf16.msra.mxu0 0
        %487 = vmatprep.subr.bf16.mxu0 0
        %488 = vmatpush1.bf16.msra.mxu0 0
        %489 = vmatprep.subr.bf16.mxu0 0
        %490 = vmatpush1.bf16.msra.mxu0 0
        %491 = vmatprep.subr.bf16.mxu0 0
        %492 = vmatpush1.bf16.msra.mxu0 0
        %493 = vmatprep.subr.bf16.mxu0 0
        %494 = vmatpush1.bf16.msra.mxu0 0
        %495 = vmatprep.mubr.bf16.mxu0 0
        %496 = vmatmul.mubr.bf16.gmra.mrb[0].mxu0 %v458
        %v497 = vpop.f32.mrb[0].mxu0
        %v498 = vadd.f32 %v429, %v497
        %v499 = vpop.f32.mrb[0].mxu0
        %v500 = vpop.f32.mrb[0].mxu0
        %v501 = vadd.f32 %v434, %v500
        %v502 = vpop.f32.mrb[0].mxu0
        %503 = vmatprep.mubr.bf16.mxu0 0
        %504 = vmatmul.mubr.bf16.gmra.mrb[0].mxu0 %v461
        %v505 = vpop.f32.mrb[0].mxu0
        %v506 = vadd.f32 %v439, %v505
        %v507 = vpop.f32.mrb[0].mxu0
        %v508 = vpop.f32.mrb[0].mxu0
        %v509 = vadd.f32 %v444, %v508
        %v510 = vpop.f32.mrb[0].mxu0
        %511 = vdwg.mxu0
        %v512 = vmax.f32 %v498, 0.0
        %v513 = vmax.f32 %v501, 0.0
        %v514 = vmax.f32 %v506, 0.0
        %v515 = vmax.f32 %v509, 0.0
        %v516 = vpack.c.bf16 %v513, %v512
        %v517 = vpack.c.bf16 %v515, %v514
        %519 = vset.pattern.permute.xlu0 0
        %520 = vperm.xlu0 %519, %v254
        %v521 = vpop.permute.xlu0 %520
        %524 = vset.pattern.permute.xlu0 0
        %525 = vperm.xlu0 %524, %v255
        %v526 = vpop.permute.xlu0 %525
        %v530 = vunpack.c.l.b16 %v238
        %v531 = vunpack.c.l.b16 %v239
        %v532 = vpack.c.b16 %v531, %v530
        %vm533 = vcmask 261120
        %v535 = vsel %vm533, %v532, 0
        %537 = vmatprep.subr.bf16.mxu0 0
        %538 = vmatpush1.bf16.msra.mxu0 %v516
        %539 = vmatprep.subr.bf16.mxu0 0
        %540 = vmatpush1.bf16.msra.mxu0 %v517
        %541 = vmatprep.subr.bf16.mxu0 0
        %542 = vmatpush1.bf16.msra.mxu0 0
        %543 = vmatprep.subr.bf16.mxu0 0
        %544 = vmatpush1.bf16.msra.mxu0 0
        %545 = vmatprep.subr.bf16.mxu0 0
        %546 = vmatpush1.bf16.msra.mxu0 0
        %547 = vmatprep.subr.bf16.mxu0 0
        %548 = vmatpush1.bf16.msra.mxu0 0
        %549 = vmatprep.subr.bf16.mxu0 0
        %550 = vmatpush1.bf16.msra.mxu0 0
        %551 = vmatprep.subr.bf16.mxu0 0
        %552 = vmatpush1.bf16.msra.mxu0 0
        %553 = vmatprep.subr.bf16.mxu0 0
        %554 = vmatpush1.bf16.msra.mxu0 0
        %555 = vmatprep.subr.bf16.mxu0 0
        %556 = vmatpush1.bf16.msra.mxu0 0
        %557 = vmatprep.subr.bf16.mxu0 0
        %558 = vmatpush1.bf16.msra.mxu0 0
        %559 = vmatprep.subr.bf16.mxu0 0
        %560 = vmatpush1.bf16.msra.mxu0 0
        %561 = vmatprep.subr.bf16.mxu0 0
        %562 = vmatpush1.bf16.msra.mxu0 0
        %563 = vmatprep.subr.bf16.mxu0 0
        %564 = vmatpush1.bf16.msra.mxu0 0
        %565 = vmatprep.subr.bf16.mxu0 0
        %566 = vmatpush1.bf16.msra.mxu0 0
        %567 = vmatprep.subr.bf16.mxu0 0
        %568 = vmatpush1.bf16.msra.mxu0 0
        %569 = vmatprep.mubr.bf16.mxu0 0
        %570 = vmatmul.mubr.bf16.gmra.mrb[0].mxu0 %v535
        %v571 = vpop.f32.mrb[0].mxu0
        %v572 = vadd.f32 %v521, %v571
        %v573 = vpop.f32.mrb[0].mxu0
        %v574 = vpop.f32.mrb[0].mxu0
        %v575 = vadd.f32 %v526, %v574
        %v576 = vpop.f32.mrb[0].mxu0
        %577 = vdwg.mxu0
        %v578 = vmax.f32 %v572, 0.0
        %v579 = vmax.f32 %v575, 0.0
        %v580 = vpack.c.bf16 %v579, %v578
        %582 = vset.pattern.permute.xlu0 0
        %583 = vperm.xlu0 %582, %v256
        %v584 = vpop.permute.xlu0 %583
        %vm586 = vcmask 130048
        %v588 = vsel %vm586, %v240, 0
        %590 = vmatprep.subr.bf16.mxu0 0
        %591 = vmatpush1.bf16.msra.mxu0 %v580
        %592 = vmatprep.subr.bf16.mxu0 0
        %593 = vmatpush1.bf16.msra.mxu0 0
        %594 = vmatprep.subr.bf16.mxu0 0
        %595 = vmatpush1.bf16.msra.mxu0 0
        %596 = vmatprep.subr.bf16.mxu0 0
        %597 = vmatpush1.bf16.msra.mxu0 0
        %598 = vmatprep.subr.bf16.mxu0 0
        %599 = vmatpush1.bf16.msra.mxu0 0
        %600 = vmatprep.subr.bf16.mxu0 0
        %601 = vmatpush1.bf16.msra.mxu0 0
        %602 = vmatprep.subr.bf16.mxu0 0
        %603 = vmatpush1.bf16.msra.mxu0 0
        %604 = vmatprep.subr.bf16.mxu0 0
        %605 = vmatpush1.bf16.msra.mxu0 0
        %606 = vmatprep.subr.bf16.mxu0 0
        %607 = vmatpush1.bf16.msra.mxu0 0
        %608 = vmatprep.subr.bf16.mxu0 0
        %609 = vmatpush1.bf16.msra.mxu0 0
        %610 = vmatprep.subr.bf16.mxu0 0
        %611 = vmatpush1.bf16.msra.mxu0 0
        %612 = vmatprep.subr.bf16.mxu0 0
        %613 = vmatpush1.bf16.msra.mxu0 0
        %614 = vmatprep.subr.bf16.mxu0 0
        %615 = vmatpush1.bf16.msra.mxu0 0
        %616 = vmatprep.subr.bf16.mxu0 0
        %617 = vmatpush1.bf16.msra.mxu0 0
        %618 = vmatprep.subr.bf16.mxu0 0
        %619 = vmatpush1.bf16.msra.mxu0 0
        %620 = vmatprep.subr.bf16.mxu0 0
        %621 = vmatpush1.bf16.msra.mxu0 0
        %622 = vmatprep.mubr.bf16.mxu0 0
        %623 = vmatmul.mubr.bf16.gmra.mrb[0].mxu0 %v588
        %v624 = vpop.f32.mrb[0].mxu0
        %v625 = vadd.f32 %v584, %v624
        %v626 = vpop.f32.mrb[0].mxu0
        %v627 = vpop.f32.mrb[0].mxu0
        %v628 = vpop.f32.mrb[0].mxu0
        %629 = vdwg.mxu0
        %v630 = vmax.f32 %v625, 0.0
        %v631 = vpack.c.bf16 %v630, %v630
        %633 = vset.pattern.permute.xlu0 0
        %634 = vperm.xlu0 %633, %v257
        %v635 = vpop.permute.xlu0 %634
        %vm637 = vcmask 64512
        %v639 = vsel %vm637, %v241, 0
        %vm641 = vcmask 1043456
        %v643 = vsel %vm641, %v631, 0
        %645 = vmatprep.subr.bf16.mxu0 0
        %646 = vmatpush1.bf16.msra.mxu0 %v643
        %647 = vmatprep.subr.bf16.mxu0 0
        %648 = vmatpush1.bf16.msra.mxu0 0
        %649 = vmatprep.subr.bf16.mxu0 0
        %650 = vmatpush1.bf16.msra.mxu0 0
        %651 = vmatprep.subr.bf16.mxu0 0
        %652 = vmatpush1.bf16.msra.mxu0 0
        %653 = vmatprep.subr.bf16.mxu0 0
        %654 = vmatpush1.bf16.msra.mxu0 0
        %655 = vmatprep.subr.bf16.mxu0 0
        %656 = vmatpush1.bf16.msra.mxu0 0
        %657 = vmatprep.subr.bf16.mxu0 0
        %658 = vmatpush1.bf16.msra.mxu0 0
        %659 = vmatprep.subr.bf16.mxu0 0
        %660 = vmatpush1.bf16.msra.mxu0 0
        %661 = vmatprep.subr.bf16.mxu0 0
        %662 = vmatpush1.bf16.msra.mxu0 0
        %663 = vmatprep.subr.bf16.mxu0 0
        %664 = vmatpush1.bf16.msra.mxu0 0
        %665 = vmatprep.subr.bf16.mxu0 0
        %666 = vmatpush1.bf16.msra.mxu0 0
        %667 = vmatprep.subr.bf16.mxu0 0
        %668 = vmatpush1.bf16.msra.mxu0 0
        %669 = vmatprep.subr.bf16.mxu0 0
        %670 = vmatpush1.bf16.msra.mxu0 0
        %671 = vmatprep.subr.bf16.mxu0 0
        %672 = vmatpush1.bf16.msra.mxu0 0
        %673 = vmatprep.subr.bf16.mxu0 0
        %674 = vmatpush1.bf16.msra.mxu0 0
        %675 = vmatprep.subr.bf16.mxu0 0
        %676 = vmatpush1.bf16.msra.mxu0 0
        %677 = vmatprep.mubr.bf16.mxu0 0
        %678 = vmatmul.mubr.bf16.gmra.mrb[0].mxu0 %v639
        %v679 = vpop.f32.mrb[0].mxu0
        %v680 = vadd.f32 %v635, %v679
        %v681 = vpop.f32.mrb[0].mxu0
        %v682 = vpop.f32.mrb[0].mxu0
        %v683 = vpop.f32.mrb[0].mxu0
        %684 = vdwg.mxu0
        %v685 = vxor.u32 %v680, 2147483648
        %v686 = vmul.f32 %v685, 1.442695
        %v687 = vpow.pop %v686
        %v688 = vadd.f32 %v687, 1.0
        %v689 = vrcp.pop %v688
        %v690 = vmul.f32 1.0, %v689
        %691 = vst [vmem:[%s220] sm:$0x1] %v690
        %s692 = sand.u32 %s93, 1
        %s693 = scalar_lea.sflag [#allocation4], %s692
        %s694 = sand.u32 %s93, 1
        %s695 = scalar_lea.vmem [#allocation3], %s694
        // Predicated region
        $region74: #{tpu_custom_call.1} parent=68 // pred_check
          %p696 = pneg %p103
        $region75: #{tpu_custom_call.1} parent=68 // pred_check_branch
          %698 = sbr.rel (%p696) target = $region77
        $region76: #{tpu_custom_call.1} parent=68 // pred_region
          %s700 = ssub.s32 16, 16
          %701 = vsyncadd %s693, %s700
          %s702 = smul.addr %s17, 16
          %s703 = scalar_lea.hbm %s3, %s702
          %s705 = sshll.u32 %s695, 4
          %s706 = int_to_ptr.vmem [resolvable:$true] %s705
          %708 = dma.vmem_to_hbm [thread:$0]  %s706, 16, %s703, %s693
        $region77: #{tpu_custom_call.1} parent=68 // pred_fallthru
          _
      $region69: #{tpu_custom_call.1} parent=5 // pred_fallthru
        _
      %p709 = scmp.le.s32.totalorder 2, %s12
      // Predicated region
      $region78: #{tpu_custom_call.1} parent=5 // pred_check
        %p710 = pneg %p709
      $region79: #{tpu_custom_call.1} parent=5 // pred_check_branch
        %712 = sbr.rel (%p710) target = $region81
      $region80: #{tpu_custom_call.1} parent=5 // pred_region
        %s713 = ssub.s32 %s12, 2
        // Predicated region
        $region82: #{tpu_custom_call.1} parent=80 // pred_check
          %p714 = pneg %p109
        $region83: #{tpu_custom_call.1} parent=80 // pred_check_branch
          %716 = sbr.rel (%p714) target = $region85
        $region84: #{tpu_custom_call.1} parent=80 // pred_region
          %s717 = sand.u32 %s94, 1
          %s718 = scalar_lea.sflag [#allocation4], %s717
          %s719 = sand.u32 %s94, 1
          %s720 = scalar_lea.vmem [#allocation3], %s719
          %721 = dma.done %s718, 16
        $region85: #{tpu_custom_call.1} parent=80 // pred_fallthru
          _
      $region81: #{tpu_custom_call.1} parent=5 // pred_fallthru
        _
    $region6: #{tpu_custom_call.1} parent=1 // loop_footer
      %s16 = sadd.s32 1, %s12
    $region7: #{tpu_custom_call.1} parent=1 // loop_footer_branch
      %11 = sbr.rel target = $region3
    $region8: #{tpu_custom_call.1} parent=1 // loop_exit
      _
    %722 = vsyncpa [#allocation4], 1
    %s723 = scalar_lea.sflag [#allocation4], 1
    %724 = vsyncpa %s723, 1

</llo_original>
